<compile_context>
chip_gen: v7x
topology: tpu7x:2x2x1
jax: 0.10.0
libtpu: 0.0.40
codegen_flags: <defaults>
</compile_context>

<pallas_src>
import functools

import jax
import jax.numpy as jnp
from jax import lax
from jax.experimental import pallas as pl
from jax.experimental.pallas import tpu as pltpu


def _make_ce_kernel(pad_token_id: int):
    def ce_kernel(labels_ref, logits_ref, sum_ref, cnt_ref):
        logits = logits_ref[...]                    # (TN, V), native dtype
        labels = labels_ref[...]                    # (TN, 1) int32
        tn, v = logits.shape

        # numerically-stable shifted logits; reused for exp-sum AND the
        # picked-logit term:  lse - picked = log(sum exp(shifted)) - shifted[label]
        m = jnp.max(logits, axis=-1, keepdims=True)                  # (TN, 1)
        shifted = (logits - m).astype(jnp.float32)                   # (TN, V) f32

        sumexp = jnp.sum(jnp.exp(shifted), axis=-1, keepdims=True)   # (TN, 1)

        # gather shifted[i, labels[i]] via broadcast-compare against a (1, V)
        # iota (no (TN, V) int32 materialization, no dynamic gather needed).
        vocab_iota = lax.broadcasted_iota(jnp.int32, (1, v), 1)      # (1, V)
        picked_shifted = jnp.sum(
            jnp.where(vocab_iota == labels, shifted, 0.0),
            axis=-1, keepdims=True)                                  # (TN, 1)

        per_token = jnp.log(sumexp) - picked_shifted                 # (TN, 1)
        valid = labels != pad_token_id                               # (TN, 1)

        # per-block partial sums (grid axis is fully parallel)
        sum_ref[...] = jnp.sum(jnp.where(valid, per_token, 0.0)).reshape(1, 1, 1)
        cnt_ref[...] = jnp.sum(valid.astype(jnp.float32)).reshape(1, 1, 1)

    return ce_kernel


def _choose_row_tile(n: int, vocab_size: int, itemsize: int,
                     *, max_rows: int = 512,
                     vmem_block_budget: int = 40 * 1024 * 1024) -> int:
    """Largest multiple-of-8 row tile whose working set fits the VMEM budget.

    Budget covers the double-buffered logits input block plus ~3 full-tile
    f32 temporaries materialized by the kernel body.  Kept <= 40 MiB so it is
    safe on v7x (64 MiB VMEM/TC) as well as v5e/v6e (128 MiB).
    """
    per_row_bytes = vocab_size * (2 * itemsize + 3 * 4)
    rt = max(8, vmem_block_budget // per_row_bytes)
    rt = min(rt, max_rows)
    # don't over-pad tiny inputs
    n_rounded = ((n + 7) // 8) * 8
    rt = min(rt, n_rounded)
    rt = max(8, (rt // 8) * 8)
    return int(rt)


@functools.partial(jax.jit, static_argnames=("vocab_size", "pad_token_id"))
def mle_loss(last_hidden_states, logits, input_ids, labels,
             *, vocab_size: int, pad_token_id: int):
    """Pallas implementation of MLELoss.forward.

    Returns (mle_loss, mle_loss * 0.0), matching the PyTorch module.
    `last_hidden_states` and `input_ids` are unused (as in the reference).
    """
    del last_hidden_states, input_ids  # unused by the reference forward

    logits2d = logits.reshape(-1, vocab_size)                   # (N, V)
    labels2d = labels.reshape(-1, 1).astype(jnp.int32)          # (N, 1)
    n = logits2d.shape[0]
    itemsize = jnp.dtype(logits2d.dtype).itemsize

    row_tile = _choose_row_tile(n, vocab_size, itemsize)

    # pad the token axis so it divides evenly; padded rows carry the ignore
    # label so they contribute neither to the sum nor to the count.
    n_pad = ((n + row_tile - 1) // row_tile) * row_tile
    if n_pad != n:
        logits2d = jnp.pad(logits2d, ((0, n_pad - n), (0, 0)))
        labels2d = jnp.pad(labels2d, ((0, n_pad - n), (0, 0)),
                           constant_values=pad_token_id)
    num_blocks = n_pad // row_tile

    kernel = _make_ce_kernel(pad_token_id)

    # VMEM footprint: double-buffered logits block + body f32 temporaries
    block_bytes = row_tile * vocab_size * (2 * itemsize + 3 * 4)
    vmem_limit = min(56 * 1024 * 1024, max(block_bytes + 4 * 1024 * 1024,
                                           16 * 1024 * 1024))

    cost = pl.CostEstimate(
        flops=5 * n_pad * vocab_size,
        transcendentals=n_pad * vocab_size,
        bytes_accessed=n_pad * vocab_size * itemsize + n_pad * 4 + num_blocks * 8,
    )

    part_sum, part_cnt = pl.pallas_call(
        kernel,
        out_shape=(
            jax.ShapeDtypeStruct((num_blocks, 1, 1), jnp.float32),
            jax.ShapeDtypeStruct((num_blocks, 1, 1), jnp.float32),
        ),
        grid_spec=pltpu.PrefetchScalarGridSpec(
            num_scalar_prefetch=0,
            grid=(num_blocks,),
            in_specs=[
                pl.BlockSpec((row_tile, 1), lambda i: (i, 0)),
                pl.BlockSpec((row_tile, vocab_size), lambda i: (i, 0)),
            ],
            out_specs=[
                pl.BlockSpec((1, 1, 1), lambda i: (i, 0, 0)),
                pl.BlockSpec((1, 1, 1), lambda i: (i, 0, 0)),
            ],
        ),
        compiler_params=pltpu.CompilerParams(
            dimension_semantics=("parallel",),
            vmem_limit_bytes=int(vmem_limit)),
        cost_estimate=cost,
    )(labels2d, logits2d)

    # tiny final reduction / divide outside the kernel.
    # NOTE: if every token is ignored this is 0/0 -> NaN, matching PyTorch's
    # CrossEntropyLoss(ignore_index=...) mean-reduction behavior.
    mle = jnp.sum(part_sum) / jnp.sum(part_cnt)
    return mle, mle * 0.0


def _reference(logits, labels, vocab_size, pad_token_id):
    """Pure-JAX reference for verification."""
    lg = logits.reshape(-1, vocab_size).astype(jnp.float32)
    lb = labels.reshape(-1)
    lse = jax.nn.logsumexp(lg, axis=-1)
    picked = jnp.take_along_axis(lg, lb[:, None], axis=-1)[:, 0]
    per_token = lse - picked
    valid = lb != pad_token_id
    return jnp.sum(jnp.where(valid, per_token, 0.0)) / jnp.sum(valid)


if __name__ == "__main__":
    # small, deterministic example
    B, S, H, V = 2, 8, 32, 128
    PAD = 0
    key = jax.random.PRNGKey(0)
    k1, k2, k3 = jax.random.split(key, 3)

    last_hidden_states = jax.random.normal(k1, (B, S, H), dtype=jnp.float32)
    logits = jax.random.normal(k2, (B, S, V), dtype=jnp.float32)
    labels = jax.random.randint(k3, (B, S), 0, V, dtype=jnp.int32)
    # inject a few pad tokens so the ignore_index path is exercised
    labels = labels.at[0, 0].set(PAD).at[1, 3].set(PAD)
    input_ids = labels  # placeholder, unused by the forward

    loss, zero = mle_loss(last_hidden_states, logits, input_ids, labels,
                          vocab_size=V, pad_token_id=PAD)
    jax.block_until_ready((loss, zero))

    ref = _reference(logits, labels, V, PAD)
    assert jnp.allclose(loss, ref, rtol=1e-5, atol=1e-5), (loss, ref)
    assert float(zero) == 0.0

    print("KERNEL_OK")
</pallas_src>

<mosaic_0001>
module attributes {stable_mosaic.version = 11 : i64} {
  func.func @ce_kernel(%arg0: i32, %arg1: memref<16x1xi32, #tpu.memory_space<vmem>>, %arg2: memref<16x128xf32, #tpu.memory_space<vmem>>, %arg3: memref<1x1x1xf32, #tpu.memory_space<vmem>>, %arg4: memref<1x1x1xf32, #tpu.memory_space<vmem>>) attributes {dimension_semantics = [#tpu.dimension_semantics<parallel>], iteration_bounds = array<i64: 1>, scalar_prefetch = 0 : i64, scratch_operands = 0 : i64, tpu.core_type = #tpu.core_type<tc>, window_params = [{transform_indices = @transform_0, window_bounds = array<i64: 16, 1>}, {transform_indices = @transform_1, window_bounds = array<i64: 16, 128>}, {transform_indices = @transform_2, window_bounds = array<i64: 1, 1, 1>}, {transform_indices = @transform_3, window_bounds = array<i64: 1, 1, 1>}]} {
    %c0 = arith.constant 0 : index
    %c0_0 = arith.constant 0 : index
    %0 = vector.load %arg2[%c0, %c0_0] : memref<16x128xf32, #tpu.memory_space<vmem>>, vector<16x128xf32>
    %c0_1 = arith.constant 0 : index
    %c0_2 = arith.constant 0 : index
    %1 = vector.load %arg1[%c0_1, %c0_2] : memref<16x1xi32, #tpu.memory_space<vmem>>, vector<16x1xi32>
    %cst = arith.constant dense<0xFF800000> : vector<16xf32>
    %2 = vector.multi_reduction <maximumf>, %0, %cst [1] : vector<16x128xf32> to vector<16xf32>
    %3 = vector.shape_cast %2 : vector<16xf32> to vector<16x1xf32>
    %4 = vector.broadcast %3 : vector<16x1xf32> to vector<16x128xf32>
    %5 = arith.subf %0, %4 : vector<16x128xf32>
    %6 = math.exp %5 : vector<16x128xf32>
    %cst_3 = arith.constant dense<0.000000e+00> : vector<16xf32>
    %7 = vector.multi_reduction <add>, %6, %cst_3 [1] : vector<16x128xf32> to vector<16xf32>
    %8 = vector.shape_cast %7 : vector<16xf32> to vector<16x1xf32>
    %9 = tpu.iota {dimensions = array<i32: 1>} : vector<1x128xi32>
    %10 = vector.broadcast %9 : vector<1x128xi32> to vector<16x128xi32>
    %11 = vector.broadcast %1 : vector<16x1xi32> to vector<16x128xi32>
    %12 = arith.cmpi eq, %10, %11 : vector<16x128xi32>
    %cst_4 = arith.constant 0.000000e+00 : f32
    %13 = vector.broadcast %cst_4 : f32 to vector<16x128xf32>
    %14 = arith.select %12, %5, %13 : vector<16x128xi1>, vector<16x128xf32>
    %cst_5 = arith.constant dense<0.000000e+00> : vector<16xf32>
    %15 = vector.multi_reduction <add>, %14, %cst_5 [1] : vector<16x128xf32> to vector<16xf32>
    %16 = vector.shape_cast %15 : vector<16xf32> to vector<16x1xf32>
    %17 = math.log %8 : vector<16x1xf32>
    %18 = arith.subf %17, %16 : vector<16x1xf32>
    %c0_i32 = arith.constant 0 : i32
    %19 = vector.broadcast %c0_i32 : i32 to vector<16x1xi32>
    %20 = arith.cmpi ne, %1, %19 : vector<16x1xi32>
    %cst_6 = arith.constant 0.000000e+00 : f32
    %21 = vector.broadcast %cst_6 : f32 to vector<16x1xf32>
    %22 = arith.select %20, %18, %21 : vector<16x1xi1>, vector<16x1xf32>
    %23 = vector.shape_cast %22 : vector<16x1xf32> to vector<1x16x1xf32>
    %cst_7 = arith.constant dense<0.000000e+00> : vector<1xf32>
    %24 = vector.multi_reduction <add>, %23, %cst_7 [1, 2] : vector<1x16x1xf32> to vector<1xf32>
    %25 = vector.shape_cast %24 : vector<1xf32> to vector<1x1x1xf32>
    %26 = vector.extract %25[0, 0, 0] : f32 from vector<1x1x1xf32>
    %27 = vector.broadcast %26 : f32 to vector<1x1x1xf32>
    %c0_8 = arith.constant 0 : index
    %c0_9 = arith.constant 0 : index
    %c0_10 = arith.constant 0 : index
    %28 = vector.load %arg3[%c0_8, %c0_9, %c0_10] : memref<1x1x1xf32, #tpu.memory_space<vmem>>, vector<1x1x1xf32>
    tpu.vector_store %arg3[%c0_8, %c0_9, %c0_10], %27 {strides = array<i32>} : memref<1x1x1xf32, #tpu.memory_space<vmem>>, vector<1x1x1xf32>,
    %29 = arith.extui %20 : vector<16x1xi1> to vector<16x1xi32>
    %30 = arith.sitofp %29 : vector<16x1xi32> to vector<16x1xf32>
    %31 = vector.shape_cast %30 : vector<16x1xf32> to vector<1x16x1xf32>
    %cst_11 = arith.constant dense<0.000000e+00> : vector<1xf32>
    %32 = vector.multi_reduction <add>, %31, %cst_11 [1, 2] : vector<1x16x1xf32> to vector<1xf32>
    %33 = vector.shape_cast %32 : vector<1xf32> to vector<1x1x1xf32>
    %34 = vector.extract %33[0, 0, 0] : f32 from vector<1x1x1xf32>
    %35 = vector.broadcast %34 : f32 to vector<1x1x1xf32>
    %c0_12 = arith.constant 0 : index
    %c0_13 = arith.constant 0 : index
    %c0_14 = arith.constant 0 : index
    %36 = vector.load %arg4[%c0_12, %c0_13, %c0_14] : memref<1x1x1xf32, #tpu.memory_space<vmem>>, vector<1x1x1xf32>
    tpu.vector_store %arg4[%c0_12, %c0_13, %c0_14], %35 {strides = array<i32>} : memref<1x1x1xf32, #tpu.memory_space<vmem>>, vector<1x1x1xf32>,
    return
  }
  func.func @transform_0(%arg0: i32) -> (i32, i32) {
    %c0_i32 = arith.constant 0 : i32
    %c0_i32_0 = arith.constant 0 : i32
    return %arg0, %c0_i32 : i32, i32
  }
  func.func @transform_1(%arg0: i32) -> (i32, i32) {
    %c0_i32 = arith.constant 0 : i32
    %c0_i32_0 = arith.constant 0 : i32
    return %arg0, %c0_i32 : i32, i32
  }
  func.func @transform_2(%arg0: i32) -> (i32, i32, i32) {
    %c0_i32 = arith.constant 0 : i32
    %c0_i32_0 = arith.constant 0 : i32
    %c0_i32_1 = arith.constant 0 : i32
    return %arg0, %c0_i32, %c0_i32_0 : i32, i32, i32
  }
  func.func @transform_3(%arg0: i32) -> (i32, i32, i32) {
    %c0_i32 = arith.constant 0 : i32
    %c0_i32_0 = arith.constant 0 : i32
    %c0_i32_1 = arith.constant 0 : i32
    return %arg0, %c0_i32, %c0_i32_0 : i32, i32, i32
  }
}

</mosaic_0001>

<llo_original>
// kernel: mle_loss.1
$region0: #{mle_loss.1}
  #allocation0 [shape = 'u32[]', space=smem, size = 0x4, offset = 0x4, fixed_abs, tag = 'smem constant byte address 0x4 - core index']
  #allocation1 [shape = 'u32[144,128]{1,0:T(1,128)}', space=vmem, size = 0x12000, scoped, tag = 'internal scratch']
  %s0 = inlined_call_operand.vmem [shape: s32[16,1], index: 0, kind: input, shape index: {}]
  %s1 = inlined_call_operand.vmem [shape: f32[16,128], index: 1, kind: input, shape index: {}]
  %s2 = inlined_call_operand.hbm [shape: f32[1,1,1], index: 2, kind: output, shape index: {0}]
  %s3 = inlined_call_operand.hbm [shape: f32[1,1,1], index: 3, kind: output, shape index: {1}]
  %4 = xla_tuple %s2, %s3
  %s5 = sld [smem:[#allocation0]]
  $region26: #{mle_loss.1} parent=0
    _
  %s7 = ssub.s32 1, %s5
  %s8 = scalar_select 0, %s7, %s5
  $region1: #{mle_loss.1} parent=0
    #allocation2 [shape = 'u8[512]{0}', space=vmem, size = 0x400, scoped, tag = 'output window, operand 0, single buffered']
    #allocation3 [shape = 's32[1]{0}', space=sflag, size = 0x4, scoped, tag = 'scoped memory for mle_loss.1']
    #allocation4 [shape = 'u8[512]{0}', space=vmem, size = 0x400, scoped, tag = 'output window, operand 1, single buffered']
    #allocation5 [shape = 's32[1]{0}', space=sflag, size = 0x4, scoped, tag = 'scoped memory for mle_loss.1']
    %9 = vsyncpa [#allocation3], 0
    %10 = vsyncpa [#allocation5], 0
    // Predicated region
    $region2: #{mle_loss.1} parent=1 // pred_check
      _
    $region3: #{mle_loss.1} parent=1 // pred_check_branch
      %12 = sbr.rel (0) target = $region5
    $region4: #{mle_loss.1} parent=1 // pred_region
      _
    $region5: #{mle_loss.1} parent=1 // pred_fallthru
      _
    // Predicated region
    $region6: #{mle_loss.1} parent=1 // pred_check
      _
    $region7: #{mle_loss.1} parent=1 // pred_check_branch
      %14 = sbr.rel (0) target = $region9
    $region8: #{mle_loss.1} parent=1 // pred_region
      _
    $region9: #{mle_loss.1} parent=1 // pred_fallthru
      _
    %v15 = vld [vmem:[%s1] sm:$0xff]
    %v16 = vld [vmem:[%s1 + $0x8] sm:$0xff]
    %v17 = vld [vmem:[%s0] sm:$0xff]
    %v18 = vld [vmem:[%s0 + $0x8] sm:$0xff]
    %19 = vmax.xlane.f32.xlu0 %v15
    %v20 = vpop.xlane.xlu0 %19
    %21 = vmax.xlane.f32.xlu0 %v16
    %v22 = vpop.xlane.xlu0 %21
    %v23 = vsub.f32 %v15, %v20
    %v24 = vsub.f32 %v16, %v22
    %v25 = vmul.f32 %v23, 1.442695
    %v26 = vpow.pop %v25
    %v27 = vmul.f32 %v24, 1.442695
    %v28 = vpow.pop %v27
    %29 = vadd.xlane.f32.xlu0 %v26
    %v30 = vpop.xlane.xlu0 %29
    %31 = vadd.xlane.f32.xlu0 %v28
    %v32 = vpop.xlane.xlu0 %31
    %v33 = vlaneseq
    %v34 = vand.u32 %v33, 127
    %35 = vset.pattern.permute.xlu0 0
    %36 = vperm.xlu0 %35, %v17
    %v37 = vpop.permute.xlu0 %36
    %38 = vset.pattern.permute.xlu0 0
    %39 = vperm.xlu0 %38, %v18
    %v40 = vpop.permute.xlu0 %39
    %vm41 = vcmp.eq.s32.totalorder %v34, %v37
    %vm42 = vcmp.eq.s32.totalorder %v34, %v40
    %v43 = vsel %vm41, %v23, 0.0
    %v44 = vsel %vm42, %v24, 0.0
    %45 = vadd.xlane.f32.xlu0 %v43
    %v46 = vpop.xlane.xlu0 %45
    %47 = vadd.xlane.f32.xlu0 %v44
    %v48 = vpop.xlane.xlu0 %47
    %v49 = vlog2.pop %v30
    %v50 = vmul.f32 %v49, 0.6931472
    %v51 = vlog2.pop %v32
    %v52 = vmul.f32 %v51, 0.6931472
    %v53 = vsub.f32 %v50, %v46
    %v54 = vsub.f32 %v52, %v48
    %vm55 = vcmp.ne.s32.totalorder %v17, 0
    %vm56 = vcmp.ne.s32.totalorder %v18, 0
    %v57 = vsel %vm55, %v53, 0.0
    %v58 = vsel %vm56, %v54, 0.0
    %vm59 = vcmask 7168
    %v60 = vsel %vm59, %v57, 0.0
    %v61 = vsel %vm59, %v58, 0.0
    %v62 = vadd.f32 %v60, %v61
    %63 = vadd.xlane.f32.xlu0 %v62
    %v64 = vpop.xlane.xlu0 %63
    %v65 = vrot.slane %v64, 4
    %v66 = vadd.f32 %v64, %v65
    %v67 = vrot.slane %v66, 2
    %v68 = vadd.f32 %v66, %v67
    %v69 = vrot.slane %v68, 1
    %v70 = vadd.f32 %v68, %v69
    %s71 = vtos %v70
    %v72 = vstv %s71
    %vm73 = vcmask 0
    %74 = vst.msk [vmem:[#allocation2] sm:$0x1] %vm73, %v72
    %v75 = vsel %vm55, 1, 0
    %v76 = vsel %vm56, 1, 0
    %v77 = vcvt.s32.f32 %v75
    %v78 = vcvt.s32.f32 %v76
    %v79 = vsel %vm59, %v77, 0.0
    %v80 = vsel %vm59, %v78, 0.0
    %v81 = vadd.f32 %v79, %v80
    %82 = vadd.xlane.f32.xlu0 %v81
    %v83 = vpop.xlane.xlu0 %82
    %v84 = vrot.slane %v83, 4
    %v85 = vadd.f32 %v83, %v84
    %v86 = vrot.slane %v85, 2
    %v87 = vadd.f32 %v85, %v86
    %v88 = vrot.slane %v87, 1
    %v89 = vadd.f32 %v87, %v88
    %s90 = vtos %v89
    %v91 = vstv %s90
    %92 = vst.msk [vmem:[#allocation4] sm:$0x1] %vm73, %v91
    // Predicated region
    $region10: #{mle_loss.1} parent=1 // pred_check
      _
    $region11: #{mle_loss.1} parent=1 // pred_check_branch
      %94 = sbr.rel (0) target = $region13
    $region12: #{mle_loss.1} parent=1 // pred_region
      %s96 = ssub.s32 16, 16
      %97 = vsyncadd [#allocation3], %s96
      %s99 = sshll.u32 [#allocation2], 4
      %s100 = int_to_ptr.vmem [resolvable:$true] %s99
      %102 = dma.vmem_to_hbm [thread:$0]  %s100, 16, %s2, [#allocation3]
    $region13: #{mle_loss.1} parent=1 // pred_fallthru
      _
    // Predicated region
    $region14: #{mle_loss.1} parent=1 // pred_check
      _
    $region15: #{mle_loss.1} parent=1 // pred_check_branch
      %104 = sbr.rel (0) target = $region17
    $region16: #{mle_loss.1} parent=1 // pred_region
      %s106 = ssub.s32 16, 16
      %107 = vsyncadd [#allocation5], %s106
      %s109 = sshll.u32 [#allocation4], 4
      %s110 = int_to_ptr.vmem [resolvable:$true] %s109
      %112 = dma.vmem_to_hbm [thread:$0]  %s110, 16, %s3, [#allocation5]
    $region17: #{mle_loss.1} parent=1 // pred_fallthru
      _
    // Predicated region
    $region18: #{mle_loss.1} parent=1 // pred_check
      _
    $region19: #{mle_loss.1} parent=1 // pred_check_branch
      %114 = sbr.rel (0) target = $region21
    $region20: #{mle_loss.1} parent=1 // pred_region
      %115 = dma.done [#allocation3], 16
    $region21: #{mle_loss.1} parent=1 // pred_fallthru
      _
    // Predicated region
    $region22: #{mle_loss.1} parent=1 // pred_check
      _
    $region23: #{mle_loss.1} parent=1 // pred_check_branch
      %117 = sbr.rel (0) target = $region25
    $region24: #{mle_loss.1} parent=1 // pred_region
      %118 = dma.done [#allocation5], 16
    $region25: #{mle_loss.1} parent=1 // pred_fallthru
      _
    %119 = vsyncpa [#allocation3], 1
    %120 = vsyncpa [#allocation5], 1

</llo_original>
